<compile_context>
chip_gen: v7x
topology: tpu7x:2x2x1
jax: 0.10.0
libtpu: 0.0.40
codegen_flags: <defaults>
</compile_context>

<pallas_src>
import numpy as np
import jax
import jax.numpy as jnp
from jax.experimental import pallas as pl
from jax.experimental.pallas import tpu as pltpu

LANE = 128


# ----------------------------------------------------------------------------
# small helpers
# ----------------------------------------------------------------------------
def _rup(n, m):
    return ((n + m - 1) // m) * m


def _pick_tile(n, preferred):
    """Largest multiple of 128 that divides n (n a multiple of 128) and is
    <= preferred (falls back to 128, which always divides n)."""
    t = max(LANE, min(_rup(preferred, LANE), n))
    while n % t:
        t -= LANE
    return t


def _tile_eff(t):
    """Measured fraction of HBM roofline for a streamed tile of width t."""
    if t >= 512:
        return 0.86
    if t >= 384:
        return 0.75
    if t >= 256:
        return 0.63
    return 0.29


def _choose_layout(n, tm_pref=1024, tk_pref=2048):
    """Pick padded node count + (tm, tk): trade quadratic zero-padding of the
    N x N mask against the bandwidth efficiency of small tiles."""
    best = None
    for align in (LANE, 256, 512, 1024, 2048):
        np_ = _rup(max(n, 1), align)
        tm = _pick_tile(np_, tm_pref)
        tk = _pick_tile(np_, tk_pref)
        # keep >=2 row tiles (megacore sharding on v7x) while tm stays large
        if np_ >= 2 * 512 and np_ // tm < 2:
            tm = _pick_tile(np_, np_ // 2)
        cost = (np_ * np_) / _tile_eff(min(tm, tk))
        if best is None or cost < best[0]:
            best = (cost, np_, tm, tk)
    return best[1], best[2], best[3]


def _pad2(x, rows, cols):
    return jnp.pad(x, ((0, rows - x.shape[0]), (0, cols - x.shape[1])))


def _vmem_budget_bytes():
    """Per-chip scoped-VMEM budget (~3/4 of physical: ~48 MiB on v7x,
    ~96 MiB on v5e/v6e)."""
    try:
        cap = int(pltpu.get_tpu_info().vmem_capacity_bytes)
    except Exception:
        cap = 64 << 20          # conservative (v7x-sized) fallback
    return (cap * 3) // 4


def _vmem_limit(need, budget):
    return int(min(max(int(need) + (4 << 20), 16 << 20), max(budget, 32 << 20)))


# ----------------------------------------------------------------------------
# Pallas kernels
# ----------------------------------------------------------------------------
def _proj_kernel(x_ref, w_ref, dinv_ref, o_ref):
    # o[i_tile] = d^-1/2[i_tile] * (X[i_tile] @ W1)   (rows pre-scaled for the
    # following aggregation pass; feature dims are small and resident)
    xw = jnp.dot(x_ref[...], w_ref[...], preferred_element_type=jnp.float32)
    o_ref[...] = (dinv_ref[...] * xw).astype(o_ref.dtype)


def _agg1_kernel(m_ref, xw_ref, w2_ref, b1_ref, dinv_ref, o_ref, acc_ref):
    # acc[i_tile] = sum_k M[i_tile,k_tile] @ (d^-1/2 * XW1)[k_tile]
    # finalize:    h = relu(d^-1/2[i] * acc + b1);  o = d^-1/2[i] * (h @ W2)
    k = pl.program_id(1)
    tk = m_ref.shape[1]

    @pl.when(k == 0)
    def _():
        acc_ref[...] = jnp.zeros_like(acc_ref)

    if xw_ref.shape[0] == tk:          # per-k streamed tile (fallback path)
        xw = xw_ref[...]
    else:                              # fully VMEM-resident XW1
        xw = xw_ref[pl.ds(pl.multiple_of(k * tk, tk), tk), :]

    m_bf = m_ref[...].astype(jnp.float32).astype(jnp.bfloat16)   # int8 -> bf16 in VMEM
    acc_ref[...] += jnp.dot(m_bf, xw, preferred_element_type=jnp.float32)

    @pl.when(k == pl.num_programs(1) - 1)
    def _():
        dinv = dinv_ref[...]                                     # (tm, 1) f32
        h = jnp.maximum(dinv * acc_ref[...] + b1_ref[...], 0.0)  # f32 tail
        hw = jnp.dot(h.astype(jnp.bfloat16), w2_ref[...],
                     preferred_element_type=jnp.float32)
        # note: padded rows have dinv == 0, so the relu(b1) "garbage" rows of
        # h are annihilated here (and again by M's zero columns in pass 2).
        o_ref[...] = (dinv * hw).astype(o_ref.dtype)


def _agg2_kernel(m_ref, hw_ref, b2_ref, dinv_ref, o_ref, acc_ref):
    # out[i_tile] = d^-1/2[i] * sum_k M[i_tile,k_tile] @ (d^-1/2 * HW2)[k_tile] + b2
    k = pl.program_id(1)
    tk = m_ref.shape[1]

    @pl.when(k == 0)
    def _():
        acc_ref[...] = jnp.zeros_like(acc_ref)

    if hw_ref.shape[0] == tk:
        hw = hw_ref[...]
    else:
        hw = hw_ref[pl.ds(pl.multiple_of(k * tk, tk), tk), :]

    m_bf = m_ref[...].astype(jnp.float32).astype(jnp.bfloat16)
    acc_ref[...] += jnp.dot(m_bf, hw, preferred_element_type=jnp.float32)

    @pl.when(k == pl.num_programs(1) - 1)
    def _():
        o_ref[...] = (dinv_ref[...] * acc_ref[...] + b2_ref[...]).astype(o_ref.dtype)


# ----------------------------------------------------------------------------
# pallas_call wrappers
# ----------------------------------------------------------------------------
def _project(x_p, w_p, dinv_p, tm, budget):
    np_, fin = x_p.shape
    fout = w_p.shape[1]
    need = (2 * tm * fin * 2 + 2 * fin * fout * 2 + 2 * tm * 4
            + 2 * tm * fout * 2 + tm * fout * 4)
    return pl.pallas_call(
        _proj_kernel,
        out_shape=jax.ShapeDtypeStruct((np_, fout), jnp.bfloat16),
        grid_spec=pltpu.PrefetchScalarGridSpec(
            num_scalar_prefetch=0,
            grid=(np_ // tm,),
            in_specs=[
                pl.BlockSpec((tm, fin), lambda i: (i, 0)),
                pl.BlockSpec((fin, fout), lambda i: (0, 0)),
                pl.BlockSpec((tm, 1), lambda i: (i, 0)),
            ],
            out_specs=pl.BlockSpec((tm, fout), lambda i: (i, 0)),
        ),
        compiler_params=pltpu.CompilerParams(
            dimension_semantics=("parallel",),
            vmem_limit_bytes=_vmem_limit(need, budget),
        ),
        cost_estimate=pl.CostEstimate(
            flops=int(2 * np_ * fin * fout), transcendentals=0,
            bytes_accessed=int(x_p.size * 2 + w_p.size * 2 + np_ * 4
                               + np_ * fout * 2)),
    )(x_p, w_p, dinv_p)


def _agg_relu_project(m_p, xw_p, w2_p, b1_p, dinv_p, tm, tk, resident, budget):
    np_ = m_p.shape[0]
    f1 = xw_p.shape[1]
    f2 = w2_p.shape[1]
    if resident:
        xw_spec = pl.BlockSpec((np_, f1), lambda i, k: (0, 0))   # one DMA total
        xw_vmem = 2 * np_ * f1 * 2
        xw_traffic = np_ * f1 * 2
    else:
        xw_spec = pl.BlockSpec((tk, f1), lambda i, k: (k, 0))    # per-k stream
        xw_vmem = 2 * tk * f1 * 2
        xw_traffic = (np_ // tm) * np_ * f1 * 2
    # int8 mask double-buffered + in-kernel f32/bf16 conversion temps + rest
    need = (2 * tm * tk * 1 + tm * tk * 6 + xw_vmem + 2 * f1 * f2 * 2
            + 2 * f1 * 4 + 2 * tm * 4 + 2 * tm * f2 * 2 + tm * f1 * 4)
    flops = 2 * np_ * np_ * f1 + 2 * np_ * f1 * f2
    bytes_acc = (np_ * np_ * 1 + xw_traffic + f1 * f2 * 2 + f1 * 4
                 + np_ * 4 + np_ * f2 * 2)
    return pl.pallas_call(
        _agg1_kernel,
        out_shape=jax.ShapeDtypeStruct((np_, f2), jnp.bfloat16),
        grid_spec=pltpu.PrefetchScalarGridSpec(
            num_scalar_prefetch=0,
            grid=(np_ // tm, np_ // tk),                  # reduction axis last
            in_specs=[
                pl.BlockSpec((tm, tk), lambda i, k: (i, k)),   # int8 mask tile
                xw_spec,                                       # d^-1/2 * (X@W1)
                pl.BlockSpec((f1, f2), lambda i, k: (0, 0)),   # W2 (resident)
                pl.BlockSpec((1, f1), lambda i, k: (0, 0)),    # b1
                pl.BlockSpec((tm, 1), lambda i, k: (i, 0)),    # d^-1/2 rows
            ],
            out_specs=pl.BlockSpec((tm, f2), lambda i, k: (i, 0)),
            scratch_shapes=[pltpu.VMEM((tm, f1), jnp.float32)],
        ),
        compiler_params=pltpu.CompilerParams(
            dimension_semantics=("parallel", "arbitrary"),
            vmem_limit_bytes=_vmem_limit(need, budget),
        ),
        cost_estimate=pl.CostEstimate(flops=int(flops), transcendentals=0,
                                      bytes_accessed=int(bytes_acc)),
    )(m_p, xw_p, w2_p, b1_p, dinv_p)


def _agg_bias(m_p, hw_p, b2_p, dinv_p, tm, tk, resident, budget):
    np_ = m_p.shape[0]
    f2 = hw_p.shape[1]
    if resident:
        hw_spec = pl.BlockSpec((np_, f2), lambda i, k: (0, 0))
        hw_vmem = 2 * np_ * f2 * 2
        hw_traffic = np_ * f2 * 2
    else:
        hw_spec = pl.BlockSpec((tk, f2), lambda i, k: (k, 0))
        hw_vmem = 2 * tk * f2 * 2
        hw_traffic = (np_ // tm) * np_ * f2 * 2
    need = (2 * tm * tk * 1 + tm * tk * 6 + hw_vmem + 2 * f2 * 4
            + 2 * tm * 4 + 2 * tm * f2 * 4 + tm * f2 * 4)
    flops = 2 * np_ * np_ * f2
    bytes_acc = np_ * np_ * 1 + hw_traffic + f2 * 4 + np_ * 4 + np_ * f2 * 4
    return pl.pallas_call(
        _agg2_kernel,
        out_shape=jax.ShapeDtypeStruct((np_, f2), jnp.float32),
        grid_spec=pltpu.PrefetchScalarGridSpec(
            num_scalar_prefetch=0,
            grid=(np_ // tm, np_ // tk),
            in_specs=[
                pl.BlockSpec((tm, tk), lambda i, k: (i, k)),   # int8 mask tile
                hw_spec,                                       # d^-1/2 * (h@W2)
                pl.BlockSpec((1, f2), lambda i, k: (0, 0)),    # b2
                pl.BlockSpec((tm, 1), lambda i, k: (i, 0)),    # d^-1/2 rows
            ],
            out_specs=pl.BlockSpec((tm, f2), lambda i, k: (i, 0)),
            scratch_shapes=[pltpu.VMEM((tm, f2), jnp.float32)],
        ),
        compiler_params=pltpu.CompilerParams(
            dimension_semantics=("parallel", "arbitrary"),
            vmem_limit_bytes=_vmem_limit(need, budget),
        ),
        cost_estimate=pl.CostEstimate(flops=int(flops), transcendentals=0,
                                      bytes_accessed=int(bytes_acc)),
    )(m_p, hw_p, b2_p, dinv_p)


# ----------------------------------------------------------------------------
# Glue: factored GCN normalization from edge_index (plain JAX, computed once).
# ----------------------------------------------------------------------------
def gcn_norm_factored(edge_index, num_nodes, padded_nodes):
    """Returns (M_int8, dinv) with A_hat = diag(dinv) @ M @ diag(dinv):
    M = A + I as a padded 0/1 int8 mask (zero rows/cols past num_nodes,
    duplicate edges collapsed), dinv = deg^-1/2 as an f32 column vector
    (0 on padded rows)."""
    src, dst = edge_index[0], edge_index[1]
    m = jnp.zeros((padded_nodes, padded_nodes), jnp.float32)
    m = m.at[dst, src].set(1.0)                  # messages flow src -> dst (PyG)
    diag = jnp.arange(num_nodes)
    m = m.at[diag, diag].set(1.0)                # (remaining) self-loops
    deg = jnp.sum(m, axis=1)
    dinv = jnp.where(deg > 0.0, 1.0 / jnp.sqrt(deg), 0.0)
    # TODO(synk): for very large graphs scatter directly into int8 / switch to
    # a blocked-sparse mask (scalar-prefetch block table) instead of dense N^2.
    return m.astype(jnp.int8), dinv.reshape(padded_nodes, 1)


# ----------------------------------------------------------------------------
# Full forward
# ----------------------------------------------------------------------------
def ppencoder_forward(x, edge_index, w1, b1, w2, b2, *,
                      tm_pref=1024, tk_pref=2048):
    n, in_dim = x.shape
    hid1, hid2 = w1.shape[1], w2.shape[1]

    np_, tm, tk = _choose_layout(n, tm_pref, tk_pref)
    inp = _rup(in_dim, LANE)
    h1p = _rup(hid1, LANE)
    h2p = _rup(hid2, LANE)
    budget = _vmem_budget_bytes()

    mask_i8, dinv = gcn_norm_factored(edge_index, n, np_)

    bf = jnp.bfloat16
    x_p = _pad2(x.astype(bf), np_, inp)
    w1_p = _pad2(w1.astype(bf), inp, h1p)
    w2_p = _pad2(w2.astype(bf), h1p, h2p)
    b1_p = jnp.pad(b1.astype(jnp.float32), (0, h1p - hid1)).reshape(1, h1p)
    b2_p = jnp.pad(b2.astype(jnp.float32), (0, h2p - hid2)).reshape(1, h2p)

    # keep the (np_, 128) intermediates fully VMEM-resident when they fit
    fmax = max(h1p, h2p)
    stream_fixed = (2 * tm * tk + tm * tk * 6 + 2 * h1p * h2p * 2
                    + 2 * fmax * 4 + 2 * tm * 4 + 2 * tm * fmax * 4
                    + tm * fmax * 4)
    resident = (2 * np_ * fmax * 2 + stream_fixed + (4 << 20)) <= budget

    xw1 = _project(x_p, w1_p, dinv, tm, budget)                       # [Np,H1p] bf16, rows * d^-1/2
    hw2 = _agg_relu_project(mask_i8, xw1, w2_p, b1_p, dinv,
                            tm, tk, resident, budget)                 # [Np,H2p] bf16, rows * d^-1/2
    out = _agg_bias(mask_i8, hw2, b2_p, dinv, tm, tk, resident, budget)
    return out[:n, :hid2]


# ----------------------------------------------------------------------------
# References (plain JAX) for correctness checks.
# ----------------------------------------------------------------------------
def ppencoder_ref(a_hat, x, w1, b1, w2, b2):
    h = jnp.maximum(a_hat @ (x @ w1) + b1[None, :], 0.0)
    return a_hat @ (h @ w2) + b2[None, :]


def ppencoder_ref_bf16(mask_f, dinv, x, w1, b1, w2, b2):
    """Mirrors the kernel's bf16 quantization points (f32 normalization)."""
    q = lambda t: t.astype(jnp.bfloat16).astype(jnp.float32)
    xw1 = q(dinv * (q(x) @ q(w1)))
    h = jnp.maximum(dinv * (mask_f @ xw1) + b1[None, :], 0.0)
    hw = q(dinv * (q(h) @ q(w2)))
    return dinv * (mask_f @ hw) + b2[None, :]


if __name__ == "__main__":
    # Small deterministic problem: N=16 nodes, in_dim=8, hid1=32, hid2=16.
    N, IN_DIM, HID1, HID2 = 16, 8, 32, 16

    key = jax.random.PRNGKey(0)
    kx, kw1, kw2 = jax.random.split(key, 3)

    x = jax.random.normal(kx, (N, IN_DIM), dtype=jnp.float32)

    # Deterministic bidirectional ring graph: edge_index shape [2, 2N].
    idx = np.arange(N)
    edge_index = jnp.asarray(
        np.concatenate(
            [np.stack([idx, (idx + 1) % N]),
             np.stack([(idx + 1) % N, idx])], axis=1),
        dtype=jnp.int32)

    # Parameters (glorot-uniform-style init, zero bias — GCNConv defaults).
    lim1 = float(np.sqrt(6.0 / (IN_DIM + HID1)))
    lim2 = float(np.sqrt(6.0 / (HID1 + HID2)))
    w1 = jax.random.uniform(kw1, (IN_DIM, HID1), jnp.float32, -lim1, lim1)
    b1 = jnp.zeros((HID1,), jnp.float32)
    w2 = jax.random.uniform(kw2, (HID1, HID2), jnp.float32, -lim2, lim2)
    b2 = jnp.zeros((HID2,), jnp.float32)

    out = jax.block_until_ready(ppencoder_forward(x, edge_index, w1, b1, w2, b2))
    assert out.shape == (N, HID2)

    # References built from the same (dedup'd, self-looped) normalization.
    mask_ref_i8, dinv_ref = gcn_norm_factored(edge_index, N, N)
    mask_f = mask_ref_i8.astype(jnp.float32)
    a_hat = dinv_ref * mask_f * dinv_ref.T

    ref_bf = jax.block_until_ready(
        ppencoder_ref_bf16(mask_f, dinv_ref, x, w1, b1, w2, b2))
    ref_32 = jax.block_until_ready(ppencoder_ref(a_hat, x, w1, b1, w2, b2))

    assert np.allclose(np.asarray(out), np.asarray(ref_bf), atol=1e-2, rtol=1e-2)
    assert np.allclose(np.asarray(out), np.asarray(ref_32), atol=5e-2, rtol=5e-2)

    print("KERNEL_OK")
</pallas_src>

<mosaic_0001>
module attributes {stable_mosaic.version = 11 : i64} {
  func.func @_proj_kernel(%arg0: i32, %arg1: memref<128x128xbf16, #tpu.memory_space<vmem>>, %arg2: memref<128x128xbf16, #tpu.memory_space<vmem>>, %arg3: memref<128x1xf32, #tpu.memory_space<vmem>>, %arg4: memref<128x128xbf16, #tpu.memory_space<vmem>>) attributes {dimension_semantics = [#tpu.dimension_semantics<parallel>], iteration_bounds = array<i64: 1>, scalar_prefetch = 0 : i64, scratch_operands = 0 : i64, tpu.core_type = #tpu.core_type<tc>, window_params = [{transform_indices = @transform_0, window_bounds = array<i64: 128, 128>}, {pipeline_mode = #tpu.pipeline_mode<synchronous>, transform_indices = @transform_1, window_bounds = array<i64: 128, 128>}, {transform_indices = @transform_2, window_bounds = array<i64: 128, 1>}, {transform_indices = @transform_3, window_bounds = array<i64: 128, 128>}]} {
    %c0 = arith.constant 0 : index
    %c0_0 = arith.constant 0 : index
    %0 = vector.load %arg1[%c0, %c0_0] : memref<128x128xbf16, #tpu.memory_space<vmem>>, vector<128x128xbf16>
    %c0_1 = arith.constant 0 : index
    %c0_2 = arith.constant 0 : index
    %1 = vector.load %arg2[%c0_1, %c0_2] : memref<128x128xbf16, #tpu.memory_space<vmem>>, vector<128x128xbf16>
    %cst = arith.constant dense<0.000000e+00> : vector<128x128xf32>
    %2 = tpu.matmul %0, %1, %cst {dimension_numbers = #tpu.dot_dimension_numbers<[1], [0], [0], [1], [0, 0, 1, 1], [], []>} : vector<128x128xbf16>, vector<128x128xbf16>, vector<128x128xf32> -> vector<128x128xf32>
    %c0_3 = arith.constant 0 : index
    %c0_4 = arith.constant 0 : index
    %3 = vector.load %arg3[%c0_3, %c0_4] : memref<128x1xf32, #tpu.memory_space<vmem>>, vector<128x1xf32>
    %4 = vector.broadcast %3 : vector<128x1xf32> to vector<128x128xf32>
    %5 = arith.mulf %4, %2 : vector<128x128xf32>
    %6 = arith.truncf %5 : vector<128x128xf32> to vector<128x128xbf16>
    %c0_5 = arith.constant 0 : index
    %c0_6 = arith.constant 0 : index
    %7 = vector.load %arg4[%c0_5, %c0_6] : memref<128x128xbf16, #tpu.memory_space<vmem>>, vector<128x128xbf16>
    tpu.vector_store %arg4[%c0_5, %c0_6], %6 {strides = array<i32>} : memref<128x128xbf16, #tpu.memory_space<vmem>>, vector<128x128xbf16>,
    return
  }
  func.func @transform_0(%arg0: i32) -> (i32, i32) {
    %c0_i32 = arith.constant 0 : i32
    %c0_i32_0 = arith.constant 0 : i32
    return %arg0, %c0_i32 : i32, i32
  }
  func.func @transform_1(%arg0: i32) -> (i32, i32) {
    %c0_i32 = arith.constant 0 : i32
    %c0_i32_0 = arith.constant 0 : i32
    %c0_i32_1 = arith.constant 0 : i32
    return %c0_i32, %c0_i32_0 : i32, i32
  }
  func.func @transform_2(%arg0: i32) -> (i32, i32) {
    %c0_i32 = arith.constant 0 : i32
    %c0_i32_0 = arith.constant 0 : i32
    return %arg0, %c0_i32 : i32, i32
  }
  func.func @transform_3(%arg0: i32) -> (i32, i32) {
    %c0_i32 = arith.constant 0 : i32
    %c0_i32_0 = arith.constant 0 : i32
    return %arg0, %c0_i32 : i32, i32
  }
}

</mosaic_0001>

<llo_original>
// kernel: tpu_custom_call.1
$region0: #{tpu_custom_call.1}
  #allocation0 [shape = 'u32[]', space=smem, size = 0x4, offset = 0x4, fixed_abs, tag = 'smem constant byte address 0x4 - core index']
  #allocation1 [shape = 'u32[144,128]{1,0:T(1,128)}', space=vmem, size = 0x12000, scoped, tag = 'internal scratch']
  %s0 = inlined_call_operand.vmem [shape: bf16[128,128], index: 0, kind: input, shape index: {}]
  %s1 = inlined_call_operand.vmem [shape: bf16[128,128], index: 1, kind: input, shape index: {}]
  %s2 = inlined_call_operand.vmem [shape: f32[128,1], index: 2, kind: input, shape index: {}]
  %s3 = inlined_call_operand.hbm [shape: bf16[128,128], index: 3, kind: output, shape index: {}]
  %s4 = sld [smem:[#allocation0]]
  $region22: #{tpu_custom_call.1} parent=0
    _
  %s6 = ssub.s32 1, %s4
  %s7 = scalar_select 0, %s6, %s4
  $region1: #{tpu_custom_call.1} parent=0
    #allocation2 [shape = 'u8[32768]{0}', space=vmem, size = 0x8000, scoped, tag = 'output window, operand 0, single buffered']
    #allocation3 [shape = 's32[1]{0}', space=sflag, size = 0x4, scoped, tag = 'scoped memory for tpu_custom_call.1']
    %8 = vsyncpa [#allocation3], 0
    // Predicated region
    $region2: #{tpu_custom_call.1} parent=1 // pred_check
      _
    $region3: #{tpu_custom_call.1} parent=1 // pred_check_branch
      %10 = sbr.rel (0) target = $region5
    $region4: #{tpu_custom_call.1} parent=1 // pred_region
      _
    $region5: #{tpu_custom_call.1} parent=1 // pred_fallthru
      _
    // Predicated region
    $region6: #{tpu_custom_call.1} parent=1 // pred_check
      _
    $region7: #{tpu_custom_call.1} parent=1 // pred_check_branch
      %12 = sbr.rel (0) target = $region9
    $region8: #{tpu_custom_call.1} parent=1 // pred_region
      _
    $region9: #{tpu_custom_call.1} parent=1 // pred_fallthru
      _
    // Predicated region
    $region10: #{tpu_custom_call.1} parent=1 // pred_check
      _
    $region11: #{tpu_custom_call.1} parent=1 // pred_check_branch
      %14 = sbr.rel (0) target = $region13
    $region12: #{tpu_custom_call.1} parent=1 // pred_region
      _
    $region13: #{tpu_custom_call.1} parent=1 // pred_fallthru
      _
    %v16 = vld [vmem:[%s0] sm:$0xf]
    %v17 = vld [vmem:[%s0 + $0x4] sm:$0xf]
    %v18 = vld [vmem:[%s0 + $0x8] sm:$0xf]
    %v19 = vld [vmem:[%s0 + $0xc] sm:$0xf]
    %v20 = vld [vmem:[%s0 + $0x10] sm:$0xf]
    %v21 = vld [vmem:[%s0 + $0x14] sm:$0xf]
    %v22 = vld [vmem:[%s0 + $0x18] sm:$0xf]
    %v23 = vld [vmem:[%s0 + $0x1c] sm:$0xf]
    %v24 = vld [vmem:[%s0 + $0x20] sm:$0xf]
    %v25 = vld [vmem:[%s0 + $0x24] sm:$0xf]
    %v26 = vld [vmem:[%s0 + $0x28] sm:$0xf]
    %v27 = vld [vmem:[%s0 + $0x2c] sm:$0xf]
    %v28 = vld [vmem:[%s0 + $0x30] sm:$0xf]
    %v29 = vld [vmem:[%s0 + $0x34] sm:$0xf]
    %v30 = vld [vmem:[%s0 + $0x38] sm:$0xf]
    %v31 = vld [vmem:[%s0 + $0x3c] sm:$0xf]
    %v32 = vld [vmem:[%s1] sm:$0xf]
    %v33 = vld [vmem:[%s1 + $0x4] sm:$0xf]
    %v34 = vld [vmem:[%s1 + $0x8] sm:$0xf]
    %v35 = vld [vmem:[%s1 + $0xc] sm:$0xf]
    %v36 = vld [vmem:[%s1 + $0x10] sm:$0xf]
    %v37 = vld [vmem:[%s1 + $0x14] sm:$0xf]
    %v38 = vld [vmem:[%s1 + $0x18] sm:$0xf]
    %v39 = vld [vmem:[%s1 + $0x1c] sm:$0xf]
    %v40 = vld [vmem:[%s1 + $0x20] sm:$0xf]
    %v41 = vld [vmem:[%s1 + $0x24] sm:$0xf]
    %v42 = vld [vmem:[%s1 + $0x28] sm:$0xf]
    %v43 = vld [vmem:[%s1 + $0x2c] sm:$0xf]
    %v44 = vld [vmem:[%s1 + $0x30] sm:$0xf]
    %v45 = vld [vmem:[%s1 + $0x34] sm:$0xf]
    %v46 = vld [vmem:[%s1 + $0x38] sm:$0xf]
    %v47 = vld [vmem:[%s1 + $0x3c] sm:$0xf]
    %v64 = vunpack.c.l.b16 %v16
    %v65 = vunpack.c.l.b16 %v17
    %v66 = vunpack.c.l.b16 %v18
    %v67 = vunpack.c.l.b16 %v19
    %v68 = vunpack.c.l.b16 %v20
    %v69 = vunpack.c.l.b16 %v21
    %v70 = vunpack.c.l.b16 %v22
    %v71 = vunpack.c.l.b16 %v23
    %v72 = vunpack.c.l.b16 %v24
    %v73 = vunpack.c.l.b16 %v25
    %v74 = vunpack.c.l.b16 %v26
    %v75 = vunpack.c.l.b16 %v27
    %v76 = vunpack.c.l.b16 %v28
    %v77 = vunpack.c.l.b16 %v29
    %v78 = vunpack.c.l.b16 %v30
    %v79 = vunpack.c.l.b16 %v31
    %v80 = vpack.c.b16 %v65, %v64
    %v81 = vpack.c.b16 %v67, %v66
    %v82 = vpack.c.b16 %v69, %v68
    %v83 = vpack.c.b16 %v71, %v70
    %v84 = vpack.c.b16 %v73, %v72
    %v85 = vpack.c.b16 %v75, %v74
    %v86 = vpack.c.b16 %v77, %v76
    %v87 = vpack.c.b16 %v79, %v78
    %v112 = vunpack.c.l.b16 %v32
    %v113 = vunpack.c.l.b16 %v33
    %v114 = vunpack.c.l.b16 %v34
    %v115 = vunpack.c.l.b16 %v35
    %v116 = vunpack.c.l.b16 %v36
    %v117 = vunpack.c.l.b16 %v37
    %v118 = vunpack.c.l.b16 %v38
    %v119 = vunpack.c.l.b16 %v39
    %v120 = vunpack.c.l.b16 %v40
    %v121 = vunpack.c.l.b16 %v41
    %v122 = vunpack.c.l.b16 %v42
    %v123 = vunpack.c.l.b16 %v43
    %v124 = vunpack.c.l.b16 %v44
    %v125 = vunpack.c.l.b16 %v45
    %v126 = vunpack.c.l.b16 %v46
    %v127 = vunpack.c.l.b16 %v47
    %v128 = vpack.c.b16 %v113, %v112
    %v129 = vpack.c.b16 %v115, %v114
    %v130 = vpack.c.b16 %v117, %v116
    %v131 = vpack.c.b16 %v119, %v118
    %v132 = vpack.c.b16 %v121, %v120
    %v133 = vpack.c.b16 %v123, %v122
    %v134 = vpack.c.b16 %v125, %v124
    %v135 = vpack.c.b16 %v127, %v126
    %144 = vmatprep.subr.bf16.mxu0 0
    %145 = vmatpush1.bf16.msra.mxu0 %v128
    %146 = vmatprep.subr.bf16.mxu0 0
    %147 = vmatpush1.bf16.msra.mxu0 %v129
    %148 = vmatprep.subr.bf16.mxu0 0
    %149 = vmatpush1.bf16.msra.mxu0 %v130
    %150 = vmatprep.subr.bf16.mxu0 0
    %151 = vmatpush1.bf16.msra.mxu0 %v131
    %152 = vmatprep.subr.bf16.mxu0 0
    %153 = vmatpush1.bf16.msra.mxu0 %v132
    %154 = vmatprep.subr.bf16.mxu0 0
    %155 = vmatpush1.bf16.msra.mxu0 %v133
    %156 = vmatprep.subr.bf16.mxu0 0
    %157 = vmatpush1.bf16.msra.mxu0 %v134
    %158 = vmatprep.subr.bf16.mxu0 0
    %159 = vmatpush1.bf16.msra.mxu0 %v135
    %160 = vmatprep.subr.bf16.mxu0 0
    %161 = vmatpush1.bf16.msra.mxu0 0
    %162 = vmatprep.subr.bf16.mxu0 0
    %163 = vmatpush1.bf16.msra.mxu0 0
    %164 = vmatprep.subr.bf16.mxu0 0
    %165 = vmatpush1.bf16.msra.mxu0 0
    %166 = vmatprep.subr.bf16.mxu0 0
    %167 = vmatpush1.bf16.msra.mxu0 0
    %168 = vmatprep.subr.bf16.mxu0 0
    %169 = vmatpush1.bf16.msra.mxu0 0
    %170 = vmatprep.subr.bf16.mxu0 0
    %171 = vmatpush1.bf16.msra.mxu0 0
    %172 = vmatprep.subr.bf16.mxu0 0
    %173 = vmatpush1.bf16.msra.mxu0 0
    %174 = vmatprep.subr.bf16.mxu0 0
    %175 = vmatpush1.bf16.msra.mxu0 0
    %176 = vmatprep.mubr.bf16.mxu0 0
    %177 = vmatmul.mubr.bf16.gmra.mrb[0].mxu0 %v80
    %v178 = vpop.f32.mrb[0].mxu0
    %v179 = vadd.f32 0.0, %v178
    %v180 = vpop.f32.mrb[0].mxu0
    %v181 = vpop.f32.mrb[0].mxu0
    %v182 = vadd.f32 0.0, %v181
    %v183 = vpop.f32.mrb[0].mxu0
    %184 = vmatprep.mubr.bf16.mxu0 0
    %185 = vmatmul.mubr.bf16.gmra.mrb[0].mxu0 %v81
    %v186 = vpop.f32.mrb[0].mxu0
    %v187 = vadd.f32 0.0, %v186
    %v188 = vpop.f32.mrb[0].mxu0
    %v189 = vpop.f32.mrb[0].mxu0
    %v190 = vadd.f32 0.0, %v189
    %v191 = vpop.f32.mrb[0].mxu0
    %192 = vmatprep.mubr.bf16.mxu0 0
    %193 = vmatmul.mubr.bf16.gmra.mrb[0].mxu0 %v82
    %v194 = vpop.f32.mrb[0].mxu0
    %v195 = vadd.f32 0.0, %v194
    %v196 = vpop.f32.mrb[0].mxu0
    %v197 = vpop.f32.mrb[0].mxu0
    %v198 = vadd.f32 0.0, %v197
    %v199 = vpop.f32.mrb[0].mxu0
    %200 = vmatprep.mubr.bf16.mxu0 0
    %201 = vmatmul.mubr.bf16.gmra.mrb[0].mxu0 %v83
    %v202 = vpop.f32.mrb[0].mxu0
    %v203 = vadd.f32 0.0, %v202
    %v204 = vpop.f32.mrb[0].mxu0
    %v205 = vpop.f32.mrb[0].mxu0
    %v206 = vadd.f32 0.0, %v205
    %v207 = vpop.f32.mrb[0].mxu0
    %208 = vmatprep.mubr.bf16.mxu0 0
    %209 = vmatmul.mubr.bf16.gmra.mrb[0].mxu0 %v84
    %v210 = vpop.f32.mrb[0].mxu0
    %v211 = vadd.f32 0.0, %v210
    %v212 = vpop.f32.mrb[0].mxu0
    %v213 = vpop.f32.mrb[0].mxu0
    %v214 = vadd.f32 0.0, %v213
    %v215 = vpop.f32.mrb[0].mxu0
    %216 = vmatprep.mubr.bf16.mxu0 0
    %217 = vmatmul.mubr.bf16.gmra.mrb[0].mxu0 %v85
    %v218 = vpop.f32.mrb[0].mxu0
    %v219 = vadd.f32 0.0, %v218
    %v220 = vpop.f32.mrb[0].mxu0
    %v221 = vpop.f32.mrb[0].mxu0
    %v222 = vadd.f32 0.0, %v221
    %v223 = vpop.f32.mrb[0].mxu0
    %224 = vmatprep.mubr.bf16.mxu0 0
    %225 = vmatmul.mubr.bf16.gmra.mrb[0].mxu0 %v86
    %v226 = vpop.f32.mrb[0].mxu0
    %v227 = vadd.f32 0.0, %v226
    %v228 = vpop.f32.mrb[0].mxu0
    %v229 = vpop.f32.mrb[0].mxu0
    %v230 = vadd.f32 0.0, %v229
    %v231 = vpop.f32.mrb[0].mxu0
    %232 = vmatprep.mubr.bf16.mxu0 0
    %233 = vmatmul.mubr.bf16.gmra.mrb[0].mxu0 %v87
    %v234 = vpop.f32.mrb[0].mxu0
    %v235 = vadd.f32 0.0, %v234
    %v236 = vpop.f32.mrb[0].mxu0
    %v237 = vpop.f32.mrb[0].mxu0
    %v238 = vadd.f32 0.0, %v237
    %v239 = vpop.f32.mrb[0].mxu0
    %240 = vdwg.mxu0
    %v241 = vld [vmem:[%s2] sm:$0xff]
    %v242 = vld [vmem:[%s2 + $0x8] sm:$0xff]
    %v243 = vld [vmem:[%s2 + $0x10] sm:$0xff]
    %v244 = vld [vmem:[%s2 + $0x18] sm:$0xff]
    %v245 = vld [vmem:[%s2 + $0x20] sm:$0xff]
    %v246 = vld [vmem:[%s2 + $0x28] sm:$0xff]
    %v247 = vld [vmem:[%s2 + $0x30] sm:$0xff]
    %v248 = vld [vmem:[%s2 + $0x38] sm:$0xff]
    %v249 = vld [vmem:[%s2 + $0x40] sm:$0xff]
    %v250 = vld [vmem:[%s2 + $0x48] sm:$0xff]
    %v251 = vld [vmem:[%s2 + $0x50] sm:$0xff]
    %v252 = vld [vmem:[%s2 + $0x58] sm:$0xff]
    %v253 = vld [vmem:[%s2 + $0x60] sm:$0xff]
    %v254 = vld [vmem:[%s2 + $0x68] sm:$0xff]
    %v255 = vld [vmem:[%s2 + $0x70] sm:$0xff]
    %v256 = vld [vmem:[%s2 + $0x78] sm:$0xff]
    %258 = vset.pattern.permute.xlu0 0
    %259 = vperm.xlu0 %258, %v241
    %v260 = vpop.permute.xlu0 %259
    %263 = vset.pattern.permute.xlu0 0
    %264 = vperm.xlu0 %263, %v242
    %v265 = vpop.permute.xlu0 %264
    %268 = vset.pattern.permute.xlu0 0
    %269 = vperm.xlu0 %268, %v243
    %v270 = vpop.permute.xlu0 %269
    %273 = vset.pattern.permute.xlu0 0
    %274 = vperm.xlu0 %273, %v244
    %v275 = vpop.permute.xlu0 %274
    %278 = vset.pattern.permute.xlu0 0
    %279 = vperm.xlu0 %278, %v245
    %v280 = vpop.permute.xlu0 %279
    %283 = vset.pattern.permute.xlu0 0
    %284 = vperm.xlu0 %283, %v246
    %v285 = vpop.permute.xlu0 %284
    %288 = vset.pattern.permute.xlu0 0
    %289 = vperm.xlu0 %288, %v247
    %v290 = vpop.permute.xlu0 %289
    %293 = vset.pattern.permute.xlu0 0
    %294 = vperm.xlu0 %293, %v248
    %v295 = vpop.permute.xlu0 %294
    %298 = vset.pattern.permute.xlu0 0
    %299 = vperm.xlu0 %298, %v249
    %v300 = vpop.permute.xlu0 %299
    %303 = vset.pattern.permute.xlu0 0
    %304 = vperm.xlu0 %303, %v250
    %v305 = vpop.permute.xlu0 %304
    %308 = vset.pattern.permute.xlu0 0
    %309 = vperm.xlu0 %308, %v251
    %v310 = vpop.permute.xlu0 %309
    %313 = vset.pattern.permute.xlu0 0
    %314 = vperm.xlu0 %313, %v252
    %v315 = vpop.permute.xlu0 %314
    %318 = vset.pattern.permute.xlu0 0
    %319 = vperm.xlu0 %318, %v253
    %v320 = vpop.permute.xlu0 %319
    %323 = vset.pattern.permute.xlu0 0
    %324 = vperm.xlu0 %323, %v254
    %v325 = vpop.permute.xlu0 %324
    %328 = vset.pattern.permute.xlu0 0
    %329 = vperm.xlu0 %328, %v255
    %v330 = vpop.permute.xlu0 %329
    %333 = vset.pattern.permute.xlu0 0
    %334 = vperm.xlu0 %333, %v256
    %v335 = vpop.permute.xlu0 %334
    %v337 = vmul.f32 %v260, %v179
    %v338 = vmul.f32 %v265, %v182
    %v339 = vmul.f32 %v270, %v187
    %v340 = vmul.f32 %v275, %v190
    %v341 = vmul.f32 %v280, %v195
    %v342 = vmul.f32 %v285, %v198
    %v343 = vmul.f32 %v290, %v203
    %v344 = vmul.f32 %v295, %v206
    %v345 = vmul.f32 %v300, %v211
    %v346 = vmul.f32 %v305, %v214
    %v347 = vmul.f32 %v310, %v219
    %v348 = vmul.f32 %v315, %v222
    %v349 = vmul.f32 %v320, %v227
    %v350 = vmul.f32 %v325, %v230
    %v351 = vmul.f32 %v330, %v235
    %v352 = vmul.f32 %v335, %v238
    %v353 = vpack.c.bf16 %v338, %v337
    %v354 = vpack.c.bf16 %v340, %v339
    %v355 = vpack.c.bf16 %v342, %v341
    %v356 = vpack.c.bf16 %v344, %v343
    %v357 = vpack.c.bf16 %v346, %v345
    %v358 = vpack.c.bf16 %v348, %v347
    %v359 = vpack.c.bf16 %v350, %v349
    %v360 = vpack.c.bf16 %v352, %v351
    %v369 = vunpack.c.l.b16 %v353
    %v370 = vunpack.c.h.b16 %v353
    %v371 = vunpack.c.l.b16 %v354
    %v372 = vunpack.c.h.b16 %v354
    %v373 = vunpack.c.l.b16 %v355
    %v374 = vunpack.c.h.b16 %v355
    %v375 = vunpack.c.l.b16 %v356
    %v376 = vunpack.c.h.b16 %v356
    %v377 = vunpack.c.l.b16 %v357
    %v378 = vunpack.c.h.b16 %v357
    %v379 = vunpack.c.l.b16 %v358
    %v380 = vunpack.c.h.b16 %v358
    %v381 = vunpack.c.l.b16 %v359
    %v382 = vunpack.c.h.b16 %v359
    %v383 = vunpack.c.l.b16 %v360
    %v384 = vunpack.c.h.b16 %v360
    %v385 = vpack.c.b16 %v369, %v369
    %v386 = vpack.c.b16 %v370, %v370
    %v387 = vpack.c.b16 %v371, %v371
    %v388 = vpack.c.b16 %v372, %v372
    %v389 = vpack.c.b16 %v373, %v373
    %v390 = vpack.c.b16 %v374, %v374
    %v391 = vpack.c.b16 %v375, %v375
    %v392 = vpack.c.b16 %v376, %v376
    %v393 = vpack.c.b16 %v377, %v377
    %v394 = vpack.c.b16 %v378, %v378
    %v395 = vpack.c.b16 %v379, %v379
    %v396 = vpack.c.b16 %v380, %v380
    %v397 = vpack.c.b16 %v381, %v381
    %v398 = vpack.c.b16 %v382, %v382
    %v399 = vpack.c.b16 %v383, %v383
    %v400 = vpack.c.b16 %v384, %v384
    %417 = vst [vmem:[#allocation2] sm:$0xf] %v385
    %418 = vst [vmem:[#allocation2 + $0x4] sm:$0xf] %v386
    %419 = vst [vmem:[#allocation2 + $0x8] sm:$0xf] %v387
    %420 = vst [vmem:[#allocation2 + $0xc] sm:$0xf] %v388
    %421 = vst [vmem:[#allocation2 + $0x10] sm:$0xf] %v389
    %422 = vst [vmem:[#allocation2 + $0x14] sm:$0xf] %v390
    %423 = vst [vmem:[#allocation2 + $0x18] sm:$0xf] %v391
    %424 = vst [vmem:[#allocation2 + $0x1c] sm:$0xf] %v392
    %425 = vst [vmem:[#allocation2 + $0x20] sm:$0xf] %v393
    %426 = vst [vmem:[#allocation2 + $0x24] sm:$0xf] %v394
    %427 = vst [vmem:[#allocation2 + $0x28] sm:$0xf] %v395
    %428 = vst [vmem:[#allocation2 + $0x2c] sm:$0xf] %v396
    %429 = vst [vmem:[#allocation2 + $0x30] sm:$0xf] %v397
    %430 = vst [vmem:[#allocation2 + $0x34] sm:$0xf] %v398
    %431 = vst [vmem:[#allocation2 + $0x38] sm:$0xf] %v399
    %432 = vst [vmem:[#allocation2 + $0x3c] sm:$0xf] %v400
    // Predicated region
    $region14: #{tpu_custom_call.1} parent=1 // pred_check
      _
    $region15: #{tpu_custom_call.1} parent=1 // pred_check_branch
      %434 = sbr.rel (0) target = $region17
    $region16: #{tpu_custom_call.1} parent=1 // pred_region
      %s436 = ssub.s32 1024, 1024
      %437 = vsyncadd [#allocation3], %s436
      %s438 = sshll.u32 [#allocation2], 4
      %s439 = int_to_ptr.vmem [resolvable:$true] %s438
      %444 = dma.vmem_to_hbm [thread:$0]  %s439, 1024, %s3, [#allocation3], 64, 64, 4
    $region17: #{tpu_custom_call.1} parent=1 // pred_fallthru
      _
    // Predicated region
    $region18: #{tpu_custom_call.1} parent=1 // pred_check
      _
    $region19: #{tpu_custom_call.1} parent=1 // pred_check_branch
      %446 = sbr.rel (0) target = $region21
    $region20: #{tpu_custom_call.1} parent=1 // pred_region
      %447 = dma.done [#allocation3], 1024
    $region21: #{tpu_custom_call.1} parent=1 // pred_fallthru
      _
    %448 = vsyncpa [#allocation3], 1

</llo_original>
